<compile_context>
chip_gen: v5e
topology: v5e:2x2
jax: 0.10.0
libtpu: 0.0.40
codegen_flags: <defaults>
</compile_context>

<pallas_src>
import functools

import jax
import jax.numpy as jnp
from jax.experimental import pallas as pl
from jax.experimental.pallas import tpu as pltpu

LANE = 128
SUBLANE = 8


def _round_up(n, m):
    return -(-n // m) * m


def _pad2d(a, rows, cols):
    r, c = a.shape
    return jnp.pad(a, ((0, rows - r), (0, cols - c)))


def _node_tiling(n, tile):
    """Pad the node count and pick a node tile that divides it."""
    n8 = _round_up(n, SUBLANE)
    if n8 <= tile:
        return n8, n8                      # single tile, full extent
    return _round_up(n, tile), tile


# ---------------------------------------------------------------------------
# Kernel A: general per-layer fused kernel (tiled over nodes).
#   grid = (N/tm, N/tk);  out[i] = sum_k adj[i,k] @ (h[k] @ W) + b  (+ReLU)
# ---------------------------------------------------------------------------
def _epilogue(acc, bias, apply_relu, out_dtype):
    r = acc + bias
    if apply_relu:
        r = jnp.maximum(r, 0.0)
    return r.astype(out_dtype)


def _fused_layer_kernel_multi(adj_ref, h_ref, w_ref, b_ref, o_ref, acc_ref,
                              *, apply_relu):
    support = jnp.dot(h_ref[...], w_ref[...],
                      preferred_element_type=jnp.float32).astype(jnp.bfloat16)
    part = jnp.dot(adj_ref[...], support, preferred_element_type=jnp.float32)

    k = pl.program_id(1)

    @pl.when(k == 0)
    def _init():
        acc_ref[...] = jnp.zeros_like(acc_ref)

    acc_ref[...] += part

    @pl.when(k == pl.num_programs(1) - 1)
    def _finalize():
        o_ref[...] = _epilogue(acc_ref[...], b_ref[...], apply_relu, o_ref.dtype)


def _fused_layer_kernel_single(adj_ref, h_ref, w_ref, b_ref, o_ref,
                               *, apply_relu):
    # Single K tile: no accumulator scratch, write straight to the output.
    support = jnp.dot(h_ref[...], w_ref[...],
                      preferred_element_type=jnp.float32).astype(jnp.bfloat16)
    part = jnp.dot(adj_ref[...], support, preferred_element_type=jnp.float32)
    o_ref[...] = _epilogue(part, b_ref[...], apply_relu, o_ref.dtype)


def gcn_fused_layer(adj_p, h_p, w_p, b_p, *, apply_relu, out_dtype, tile):
    """One fused GCN layer on padded, bf16 inputs."""
    np_ = adj_p.shape[0]
    fin = h_p.shape[1]
    fout = w_p.shape[1]
    tm = tk = tile
    assert np_ % tm == 0 and np_ % tk == 0
    grid = (np_ // tm, np_ // tk)

    if grid[1] == 1:
        kernel = functools.partial(_fused_layer_kernel_single,
                                   apply_relu=apply_relu)
        scratch = ()
    else:
        kernel = functools.partial(_fused_layer_kernel_multi,
                                   apply_relu=apply_relu)
        scratch = (pltpu.VMEM((tm, fout), jnp.float32),)

    return pl.pallas_call(
        kernel,
        out_shape=jax.ShapeDtypeStruct((np_, fout), out_dtype),
        grid_spec=pltpu.PrefetchScalarGridSpec(
            num_scalar_prefetch=0,
            grid=grid,
            in_specs=[
                pl.BlockSpec((tm, tk), lambda i, k: (i, k)),      # adj tile
                pl.BlockSpec((tk, fin), lambda i, k: (k, 0)),     # h slab
                pl.BlockSpec((fin, fout), lambda i, k: (0, 0)),   # W (resident)
                pl.BlockSpec((1, fout), lambda i, k: (0, 0)),     # bias
            ],
            out_specs=pl.BlockSpec((tm, fout), lambda i, k: (i, 0)),
            scratch_shapes=scratch,
        ),
        compiler_params=pltpu.CompilerParams(
            dimension_semantics=("parallel", "arbitrary"),
        ),
    )(adj_p, h_p, w_p, b_p)


# ---------------------------------------------------------------------------
# Kernel B: whole-network kernel — adj + activation resident in VMEM,
#   grid = (num_layers,).  Used whenever the padded problem fits in VMEM.
# ---------------------------------------------------------------------------
def _gcn_resident_kernel(x_ref, adj_ref, w_ref, b_ref, o_ref, h_ref,
                         *, n_layers):
    layer = pl.program_id(0)

    @pl.when(layer == 0)
    def _load_input():
        h_ref[...] = x_ref[...]

    support = jnp.dot(h_ref[...], w_ref[0],
                      preferred_element_type=jnp.float32).astype(jnp.bfloat16)
    z = jnp.dot(adj_ref[...], support,
                preferred_element_type=jnp.float32) + b_ref[0]

    @pl.when(layer < n_layers - 1)
    def _hidden():                                  # ReLU on all but last layer
        h_ref[...] = jnp.maximum(z, 0.0).astype(h_ref.dtype)

    @pl.when(layer == n_layers - 1)
    def _output():                                  # final layer: no activation
        o_ref[...] = z.astype(o_ref.dtype)


def _resident_vmem_bytes(np_, fp):
    # Conservative estimate (double-buffered inputs/outputs + scratch).
    return (np_ * np_ * 2 * 2            # adj bf16
            + np_ * fp * 2 * 2           # x bf16
            + fp * fp * 2 * 2            # per-layer W bf16 (streamed)
            + fp * 4 * 2                 # bias f32
            + np_ * fp * 4 * 2           # out f32
            + np_ * fp * 2)              # activation scratch bf16


def gcn_forward_resident(x_p, adj_p, w_list, b_list):
    n_layers = len(w_list)
    np_, fp = x_p.shape
    w_stack = jnp.stack(w_list)                  # (L, fp, fp) bf16
    b_stack = jnp.stack(b_list)                  # (L, 1, fp)  f32
    kernel = functools.partial(_gcn_resident_kernel, n_layers=n_layers)

    return pl.pallas_call(
        kernel,
        out_shape=jax.ShapeDtypeStruct((np_, fp), jnp.float32),
        grid_spec=pltpu.PrefetchScalarGridSpec(
            num_scalar_prefetch=0,
            grid=(n_layers,),
            in_specs=[
                pl.BlockSpec((np_, fp), lambda l: (0, 0)),      # x (layer 0)
                pl.BlockSpec((np_, np_), lambda l: (0, 0)),     # adj, resident
                pl.BlockSpec((1, fp, fp), lambda l: (l, 0, 0)),  # W_l (streamed)
                pl.BlockSpec((1, 1, fp), lambda l: (l, 0, 0)),   # b_l
            ],
            out_specs=pl.BlockSpec((np_, fp), lambda l: (0, 0)),
            scratch_shapes=(pltpu.VMEM((np_, fp), jnp.bfloat16),),
        ),
        compiler_params=pltpu.CompilerParams(
            dimension_semantics=("arbitrary",),
            vmem_limit_bytes=48 * 1024 * 1024,
        ),
    )(x_p, adj_p, w_stack, b_stack)


# ---------------------------------------------------------------------------
# Full GraphConvolution forward (inference semantics).
# ---------------------------------------------------------------------------
def graph_convolution_forward(x, adj, params, *, node_tile=256,
                              use_resident=None):
    layers = [(params["w_in"], params["b_in"])]
    layers += list(params["inner"])
    layers.append((params["w_out"], params["b_out"]))

    n = x.shape[0]
    out_dim = params["w_out"].shape[1]

    # Uniform feature padding (lane-dense outputs; padded cols stay zero).
    fp = _round_up(max(max(w.shape) for w, _ in layers), LANE)
    np_, tile = _node_tiling(n, node_tile)

    adj_p = _pad2d(adj, np_, np_).astype(jnp.bfloat16)
    x_p = _pad2d(x, np_, fp).astype(jnp.bfloat16)
    w_p = [_pad2d(w, fp, fp).astype(jnp.bfloat16) for w, _ in layers]
    b_p = [jnp.pad(b.astype(jnp.float32), (0, fp - b.shape[0])).reshape(1, fp)
           for _, b in layers]

    if use_resident is None:
        use_resident = _resident_vmem_bytes(np_, fp) <= 16 * 1024 * 1024

    if use_resident:
        out = gcn_forward_resident(x_p, adj_p, w_p, b_p)
    else:
        h = x_p
        for i, (w, b) in enumerate(zip(w_p, b_p)):
            is_last = i == len(w_p) - 1
            h = gcn_fused_layer(
                adj_p, h, w, b,
                apply_relu=not is_last,
                out_dtype=jnp.float32 if is_last else jnp.bfloat16,
                tile=tile)
        out = h

    return out[:n, :out_dim]


# ---------------------------------------------------------------------------
# Pure-JAX reference mirroring the kernels' bf16 rounding points.
# ---------------------------------------------------------------------------
def reference_forward(x, adj, params):
    bf = lambda a: a.astype(jnp.bfloat16).astype(jnp.float32)
    layers = [(params["w_in"], params["b_in"], True)]
    layers += [(w, b, True) for w, b in params["inner"]]
    layers.append((params["w_out"], params["b_out"], False))

    adj32 = bf(adj)
    h = bf(x)
    for w, b, relu in layers:
        support = bf(h @ bf(w))
        z = adj32 @ support + b.astype(jnp.float32)
        h = bf(jnp.maximum(z, 0.0)) if relu else z
    return h


# ---------------------------------------------------------------------------
# Deterministic parameter init (GCN-style uniform(-stdv, stdv), stdv=1/sqrt(F_out))
# ---------------------------------------------------------------------------
def init_params(key, input_dim, hidden_dim, output_dim, nof_layers):
    def init_layer(k, fin, fout):
        kw, kb = jax.random.split(k)
        stdv = 1.0 / jnp.sqrt(jnp.float32(fout))
        w = jax.random.uniform(kw, (fin, fout), jnp.float32, -stdv, stdv)
        b = jax.random.uniform(kb, (fout,), jnp.float32, -stdv, stdv)
        return w, b

    n_inner = nof_layers - 2
    keys = jax.random.split(key, n_inner + 2)
    w_in, b_in = init_layer(keys[0], input_dim, hidden_dim)
    inner = [init_layer(keys[1 + i], hidden_dim, hidden_dim) for i in range(n_inner)]
    w_out, b_out = init_layer(keys[-1], hidden_dim, output_dim)
    return {"w_in": w_in, "b_in": b_in, "inner": inner,
            "w_out": w_out, "b_out": b_out}


if __name__ == "__main__":
    config = {
        "input_dim": 16,
        "hidden_dim": 32,
        "output_dim": 8,
        "nof_layers": 3,   # -> 1 inner layer
        "dropout": 0.5,    # identity at inference
    }
    N_NODES = 256

    key = jax.random.PRNGKey(0)
    k_x, k_adj, k_par = jax.random.split(key, 3)

    # Node features
    x = jax.random.normal(k_x, (N_NODES, config["input_dim"]), jnp.float32)

    # Symmetric, self-looped, row-normalized adjacency (deterministic)
    a_raw = (jax.random.uniform(k_adj, (N_NODES, N_NODES)) < 0.05).astype(jnp.float32)
    a_sym = jnp.maximum(a_raw, a_raw.T) + jnp.eye(N_NODES, dtype=jnp.float32)
    adj = a_sym / jnp.sum(a_sym, axis=1, keepdims=True)

    params = init_params(k_par, config["input_dim"], config["hidden_dim"],
                         config["output_dim"], config["nof_layers"])

    ref = reference_forward(x, adj, params)

    # (a) fully fused VMEM-resident whole-network kernel (auto-selected here).
    out_resident = jax.block_until_ready(
        graph_convolution_forward(x, adj, params))
    # (b) general tiled per-layer fused kernel, single-K-tile fast path.
    out_tiled_1k = jax.block_until_ready(
        graph_convolution_forward(x, adj, params, use_resident=False,
                                  node_tile=256))
    # (c) general tiled per-layer fused kernel, multi-K-tile accumulator path.
    out_tiled_mk = jax.block_until_ready(
        graph_convolution_forward(x, adj, params, use_resident=False,
                                  node_tile=128))

    expected_shape = (N_NODES, config["output_dim"])
    for out in (out_resident, out_tiled_1k, out_tiled_mk):
        assert out.shape == expected_shape
        assert jnp.allclose(out, ref, atol=1e-2, rtol=1e-2)

    print("KERNEL_OK")
</pallas_src>

<mosaic_0001>
module attributes {stable_mosaic.version = 11 : i64} {
  func.func @_gcn_resident_kernel(%arg0: i32, %arg1: memref<256x128xbf16, #tpu.memory_space<vmem>>, %arg2: memref<256x256xbf16, #tpu.memory_space<vmem>>, %arg3: memref<1x128x128xbf16, #tpu.memory_space<vmem>>, %arg4: memref<1x1x128xf32, #tpu.memory_space<vmem>>, %arg5: memref<256x128xf32, #tpu.memory_space<vmem>>, %arg6: memref<256x128xbf16, #tpu.memory_space<vmem>>) attributes {dimension_semantics = [#tpu.dimension_semantics<arbitrary>], iteration_bounds = array<i64: 3>, scalar_prefetch = 0 : i64, scratch_operands = 1 : i64, tpu.core_type = #tpu.core_type<tc>, window_params = [{pipeline_mode = #tpu.pipeline_mode<synchronous>, transform_indices = @transform_0, window_bounds = array<i64: 256, 128>}, {pipeline_mode = #tpu.pipeline_mode<synchronous>, transform_indices = @transform_1, window_bounds = array<i64: 256, 256>}, {transform_indices = @transform_2, window_bounds = array<i64: 1, 128, 128>}, {transform_indices = @transform_3, window_bounds = array<i64: 1, 1, 128>}, {pipeline_mode = #tpu.pipeline_mode<synchronous>, transform_indices = @transform_4, window_bounds = array<i64: 256, 128>}]} {
    %c0_i32 = arith.constant 0 : i32
    %0 = arith.cmpi eq, %arg0, %c0_i32 : i32
    %1 = arith.extui %0 : i1 to i32
    %c0_i32_0 = arith.constant 0 : i32
    %2 = arith.cmpi ne, %1, %c0_i32_0 : i32
    scf.if %2 {
      %c0_14 = arith.constant 0 : index
      %c0_15 = arith.constant 0 : index
      %20 = vector.load %arg1[%c0_14, %c0_15] : memref<256x128xbf16, #tpu.memory_space<vmem>>, vector<256x128xbf16>
      %c0_16 = arith.constant 0 : index
      %c0_17 = arith.constant 0 : index
      %21 = vector.load %arg6[%c0_16, %c0_17] : memref<256x128xbf16, #tpu.memory_space<vmem>>, vector<256x128xbf16>
      tpu.vector_store %arg6[%c0_16, %c0_17], %20 {strides = array<i32>} : memref<256x128xbf16, #tpu.memory_space<vmem>>, vector<256x128xbf16>,
    } else {
    }
    %c0 = arith.constant 0 : index
    %c0_1 = arith.constant 0 : index
    %3 = vector.load %arg6[%c0, %c0_1] : memref<256x128xbf16, #tpu.memory_space<vmem>>, vector<256x128xbf16>
    %c0_2 = arith.constant 0 : index
    %c0_3 = arith.constant 0 : index
    %c0_4 = arith.constant 0 : index
    %4 = vector.load %arg3[%c0_2, %c0_3, %c0_4] : memref<1x128x128xbf16, #tpu.memory_space<vmem>>, vector<1x128x128xbf16>
    %5 = vector.shape_cast %4 : vector<1x128x128xbf16> to vector<128x128xbf16>
    %cst = arith.constant dense<0.000000e+00> : vector<256x128xf32>
    %6 = tpu.matmul %3, %5, %cst {dimension_numbers = #tpu.dot_dimension_numbers<[1], [0], [0], [1], [0, 0, 1, 1], [], []>} : vector<256x128xbf16>, vector<128x128xbf16>, vector<256x128xf32> -> vector<256x128xf32>
    %7 = arith.truncf %6 : vector<256x128xf32> to vector<256x128xbf16>
    %c0_5 = arith.constant 0 : index
    %c0_6 = arith.constant 0 : index
    %8 = vector.load %arg2[%c0_5, %c0_6] : memref<256x256xbf16, #tpu.memory_space<vmem>>, vector<256x256xbf16>
    %cst_7 = arith.constant dense<0.000000e+00> : vector<256x128xf32>
    %9 = tpu.matmul %8, %7, %cst_7 {dimension_numbers = #tpu.dot_dimension_numbers<[1], [0], [0], [1], [0, 0, 1, 1], [], []>} : vector<256x256xbf16>, vector<256x128xbf16>, vector<256x128xf32> -> vector<256x128xf32>
    %c0_8 = arith.constant 0 : index
    %c0_9 = arith.constant 0 : index
    %c0_10 = arith.constant 0 : index
    %10 = vector.load %arg4[%c0_8, %c0_9, %c0_10] : memref<1x1x128xf32, #tpu.memory_space<vmem>>, vector<1x1x128xf32>
    %11 = vector.shape_cast %10 : vector<1x1x128xf32> to vector<1x128xf32>
    %12 = vector.broadcast %11 : vector<1x128xf32> to vector<256x128xf32>
    %13 = arith.addf %9, %12 : vector<256x128xf32>
    %c2_i32 = arith.constant 2 : i32
    %14 = arith.cmpi slt, %arg0, %c2_i32 : i32
    %15 = arith.extui %14 : i1 to i32
    %c0_i32_11 = arith.constant 0 : i32
    %16 = arith.cmpi ne, %15, %c0_i32_11 : i32
    scf.if %16 {
      %cst_14 = arith.constant 0.000000e+00 : f32
      %20 = vector.broadcast %cst_14 : f32 to vector<256x128xf32>
      %21 = arith.maximumf %13, %20 : vector<256x128xf32>
      %22 = arith.truncf %21 : vector<256x128xf32> to vector<256x128xbf16>
      %c0_15 = arith.constant 0 : index
      %c0_16 = arith.constant 0 : index
      %23 = vector.load %arg6[%c0_15, %c0_16] : memref<256x128xbf16, #tpu.memory_space<vmem>>, vector<256x128xbf16>
      tpu.vector_store %arg6[%c0_15, %c0_16], %22 {strides = array<i32>} : memref<256x128xbf16, #tpu.memory_space<vmem>>, vector<256x128xbf16>,
    } else {
    }
    %c2_i32_12 = arith.constant 2 : i32
    %17 = arith.cmpi eq, %arg0, %c2_i32_12 : i32
    %18 = arith.extui %17 : i1 to i32
    %c0_i32_13 = arith.constant 0 : i32
    %19 = arith.cmpi ne, %18, %c0_i32_13 : i32
    scf.if %19 {
      %c0_14 = arith.constant 0 : index
      %c0_15 = arith.constant 0 : index
      %20 = vector.load %arg5[%c0_14, %c0_15] : memref<256x128xf32, #tpu.memory_space<vmem>>, vector<256x128xf32>
      tpu.vector_store %arg5[%c0_14, %c0_15], %13 {strides = array<i32>} : memref<256x128xf32, #tpu.memory_space<vmem>>, vector<256x128xf32>,
    } else {
    }
    return
  }
  func.func @transform_0(%arg0: i32) -> (i32, i32) {
    %c0_i32 = arith.constant 0 : i32
    %c0_i32_0 = arith.constant 0 : i32
    %c0_i32_1 = arith.constant 0 : i32
    return %c0_i32, %c0_i32_0 : i32, i32
  }
  func.func @transform_1(%arg0: i32) -> (i32, i32) {
    %c0_i32 = arith.constant 0 : i32
    %c0_i32_0 = arith.constant 0 : i32
    %c0_i32_1 = arith.constant 0 : i32
    return %c0_i32, %c0_i32_0 : i32, i32
  }
  func.func @transform_2(%arg0: i32) -> (i32, i32, i32) {
    %c0_i32 = arith.constant 0 : i32
    %c0_i32_0 = arith.constant 0 : i32
    %c0_i32_1 = arith.constant 0 : i32
    return %arg0, %c0_i32, %c0_i32_0 : i32, i32, i32
  }
  func.func @transform_3(%arg0: i32) -> (i32, i32, i32) {
    %c0_i32 = arith.constant 0 : i32
    %c0_i32_0 = arith.constant 0 : i32
    %c0_i32_1 = arith.constant 0 : i32
    return %arg0, %c0_i32, %c0_i32_0 : i32, i32, i32
  }
  func.func @transform_4(%arg0: i32) -> (i32, i32) {
    %c0_i32 = arith.constant 0 : i32
    %c0_i32_0 = arith.constant 0 : i32
    %c0_i32_1 = arith.constant 0 : i32
    return %c0_i32, %c0_i32_0 : i32, i32
  }
}

</mosaic_0001>

<llo_original>
// kernel: tpu_custom_call.1
$region0: #{tpu_custom_call.1}
  #allocation0 [shape = 'u32[]', space=smem, size = 0x4, offset = 0x4, fixed_abs, tag = 'smem constant byte address 0x4 - core index']
  #allocation1 [shape = 'u32[72,128]{1,0:T(1,128)}', space=vmem, size = 0x9000, scoped, tag = 'internal scratch']
  #allocation2 [shape = 'bf16[256,128]{1,0:T(8,128)(2,1)}', space=vmem, size = 0x10000, scoped, tag = 'scratch operand']
  %s0 = inlined_call_operand.hbm [shape: bf16[256,128], index: 0, kind: input, shape index: {}]
  %s1 = inlined_call_operand.hbm [shape: bf16[256,256], index: 1, kind: input, shape index: {}]
  %s2 = inlined_call_operand.hbm [shape: bf16[3,128,128], index: 2, kind: input, shape index: {}]
  %s3 = inlined_call_operand.hbm [shape: f32[3,1,128], index: 3, kind: input, shape index: {}]
  %s4 = inlined_call_operand.hbm [shape: f32[256,128], index: 4, kind: output, shape index: {}]
  %s5 = sld [smem:[#allocation0]]
  $region77: #{tpu_custom_call.1} parent=0
    _
  %s7 = ssub.s32 1, %s5
  %s8 = scalar_select 0, %s7, %s5
  $region1: #{tpu_custom_call.1} parent=0
    #allocation3 [shape = 'u8[65536]{0}', space=vmem, size = 0x10000, scoped, tag = 'input window, operand 0, single buffered']
    #allocation4 [shape = 's32[2]{0}', space=sflag, size = 0x8, scoped, tag = 'scoped memory for tpu_custom_call.1']
    #allocation5 [shape = 's32[2]{0}', space=sflag, size = 0x8, scoped, tag = 'scoped memory for tpu_custom_call.1']
    #allocation6 [shape = 'u8[131072]{0}', space=vmem, size = 0x20000, scoped, tag = 'input window, operand 1, single buffered']
    #allocation7 [shape = 's32[1]{0}', space=sflag, size = 0x4, scoped, tag = 'scoped memory for tpu_custom_call.1']
    #allocation8 [shape = 'u8[65536]{0}', space=vmem, size = 0x10000, scoped, tag = 'input window, operand 2']
    #allocation9 [shape = 'u8[1024]{0}', space=vmem, size = 0x400, scoped, tag = 'input window, operand 3']
    #allocation10 [shape = 'u8[131072]{0}', space=vmem, size = 0x20000, scoped, tag = 'output window, operand 0, single buffered']
    %9 = vsyncpa [#allocation4], 0
    %10 = vsyncpa [#allocation7], 0
    %11 = vsyncpa [#allocation5], 0
    loop: start=0, step=1, limit=5
    $region2: #{tpu_custom_call.1} parent=1 // loop_pre_header
      _
    $region3: #{tpu_custom_call.1} parent=1 // loop_header
      %s13 = sphi 0, %s17
      %p14 = scmp.ge.s32.totalorder %s13, 5
      %s21 = sphi 0, %s21
      %s23 = sphi 0, %s21
      %s24 = sphi 0, %s23
      %s38 = sphi 0, %s24
      %s42 = sphi 0, %s42
      %s44 = sphi 0, %s42
      %s45 = sphi 0, %s44
      %s59 = sphi 0, %s45
      %s65 = sphi 0, %s67
      %s68 = sphi 0, %s65
      %s69 = sphi 0, %s68
      %s85 = sphi 0, %s69
      %s91 = sphi 0, %s93
      %s94 = sphi 0, %s91
      %s95 = sphi 0, %s94
      %s111 = sphi 0, %s95
      %s115 = sphi 0, %s115
      %s117 = sphi 0, %s115
      %s118 = sphi 0, %s117
      %s132 = sphi 0, %s118
    $region4: #{tpu_custom_call.1} parent=1 // loop_header_branch
      %16 = sbr.rel (%p14) target = $region8
    $region5: #{tpu_custom_call.1} parent=1 // loop_body
      %s18 = ssub.s32 %s13, 1
      %s19 = ssub.s32 %s13, 2
      %s20 = sadd.s32 %s13, 1
      %s22 = sadd.s32 %s21, 1
      %p25 = scmp.eq.s32.totalorder %s13, 2
      %p26 = scmp.ne.s32.totalorder %s21, %s23
      %p27 = scmp.eq.s32.totalorder %s13, 0
      %p28 = por %p26, %p27
      %p29 = scmp.ne.s32.totalorder %s21, %s23
      %p30 = scmp.eq.s32.totalorder %s18, 2
      %p31 = por %p29, %p30
      %p32 = scmp.ne.s32.totalorder %s23, %s24
      %p33 = scmp.eq.s32.totalorder %s18, 0
      %p34 = por %p32, %p33
      %p35 = scmp.ne.s32.totalorder %s23, %s24
      %p36 = scmp.eq.s32.totalorder %s19, 2
      %p37 = por %p35, %p36
      %p39 = scmp.ne.s32.totalorder %s24, %s38
      %p40 = scmp.eq.s32.totalorder %s19, 0
      %p41 = por %p39, %p40
      %s43 = sadd.s32 %s42, 1
      %p46 = scmp.eq.s32.totalorder %s13, 2
      %p47 = scmp.ne.s32.totalorder %s42, %s44
      %p48 = scmp.eq.s32.totalorder %s13, 0
      %p49 = por %p47, %p48
      %p50 = scmp.ne.s32.totalorder %s42, %s44
      %p51 = scmp.eq.s32.totalorder %s18, 2
      %p52 = por %p50, %p51
      %p53 = scmp.ne.s32.totalorder %s44, %s45
      %p54 = scmp.eq.s32.totalorder %s18, 0
      %p55 = por %p53, %p54
      %p56 = scmp.ne.s32.totalorder %s44, %s45
      %p57 = scmp.eq.s32.totalorder %s19, 2
      %p58 = por %p56, %p57
      %p60 = scmp.ne.s32.totalorder %s45, %s59
      %p61 = scmp.eq.s32.totalorder %s19, 0
      %p62 = por %p60, %p61
      %s63 = ssub.s32 %s13, %s20
      %p64 = scmp.eq.s32.totalorder %s63, 0
      %s66 = sadd.s32 %s65, 1
      %s67 = scalar_select %p64, %s65, %s66
      %p70 = pneg %p64
      %p71 = scmp.eq.s32.totalorder %s13, 2
      %p72 = por %p70, %p71
      %p73 = scmp.ne.s32.totalorder %s65, %s68
      %p74 = scmp.eq.s32.totalorder %s13, 0
      %p75 = por %p73, %p74
      %p76 = scmp.ne.s32.totalorder %s65, %s68
      %p77 = scmp.eq.s32.totalorder %s18, 2
      %p78 = por %p76, %p77
      %p79 = scmp.ne.s32.totalorder %s68, %s69
      %p80 = scmp.eq.s32.totalorder %s18, 0
      %p81 = por %p79, %p80
      %p82 = scmp.ne.s32.totalorder %s68, %s69
      %p83 = scmp.eq.s32.totalorder %s19, 2
      %p84 = por %p82, %p83
      %p86 = scmp.ne.s32.totalorder %s69, %s85
      %p87 = scmp.eq.s32.totalorder %s19, 0
      %p88 = por %p86, %p87
      %s89 = ssub.s32 %s13, %s20
      %p90 = scmp.eq.s32.totalorder %s89, 0
      %s92 = sadd.s32 %s91, 1
      %s93 = scalar_select %p90, %s91, %s92
      %p96 = pneg %p90
      %p97 = scmp.eq.s32.totalorder %s13, 2
      %p98 = por %p96, %p97
      %p99 = scmp.ne.s32.totalorder %s91, %s94
      %p100 = scmp.eq.s32.totalorder %s13, 0
      %p101 = por %p99, %p100
      %p102 = scmp.ne.s32.totalorder %s91, %s94
      %p103 = scmp.eq.s32.totalorder %s18, 2
      %p104 = por %p102, %p103
      %p105 = scmp.ne.s32.totalorder %s94, %s95
      %p106 = scmp.eq.s32.totalorder %s18, 0
      %p107 = por %p105, %p106
      %p108 = scmp.ne.s32.totalorder %s94, %s95
      %p109 = scmp.eq.s32.totalorder %s19, 2
      %p110 = por %p108, %p109
      %p112 = scmp.ne.s32.totalorder %s95, %s111
      %p113 = scmp.eq.s32.totalorder %s19, 0
      %p114 = por %p112, %p113
      %s116 = sadd.s32 %s115, 1
      %p119 = scmp.eq.s32.totalorder %s13, 2
      %p120 = scmp.ne.s32.totalorder %s115, %s117
      %p121 = scmp.eq.s32.totalorder %s13, 0
      %p122 = por %p120, %p121
      %p123 = scmp.ne.s32.totalorder %s115, %s117
      %p124 = scmp.eq.s32.totalorder %s18, 2
      %p125 = por %p123, %p124
      %p126 = scmp.ne.s32.totalorder %s117, %s118
      %p127 = scmp.eq.s32.totalorder %s18, 0
      %p128 = por %p126, %p127
      %p129 = scmp.ne.s32.totalorder %s117, %s118
      %p130 = scmp.eq.s32.totalorder %s19, 2
      %p131 = por %p129, %p130
      %p133 = scmp.ne.s32.totalorder %s118, %s132
      %p134 = scmp.eq.s32.totalorder %s19, 0
      %p135 = por %p133, %p134
      %p136 = scmp.le.s32.totalorder 1, %s13
      %p137 = scmp.lt.s32.totalorder %s13, 4
      %p138 = pnand %p136, %p137
      %p139 = pneg %p138
      // Predicated region
      $region9: #{tpu_custom_call.1} parent=5 // pred_check
        _
      $region10: #{tpu_custom_call.1} parent=5 // pred_check_branch
        %141 = sbr.rel (%p138) target = $region12
      $region11: #{tpu_custom_call.1} parent=5 // pred_region
        %s142 = ssub.s32 %s13, 1
        // Predicated region
        $region13: #{tpu_custom_call.1} parent=11 // pred_check
          %p143 = pneg %p34
        $region14: #{tpu_custom_call.1} parent=11 // pred_check_branch
          %145 = sbr.rel (%p143) target = $region16
        $region15: #{tpu_custom_call.1} parent=11 // pred_region
          %147 = vsyncadd [#allocation4], 0
          %s148 = sshll.u32 %s0, 4
          %s149 = int_to_ptr.hbm [resolvable:$true] %s148
          %s150 = sshll.u32 [#allocation3], 4
          %s151 = int_to_ptr.vmem [resolvable:$true] %s150
          %156 = dma.hbm_to_vmem [thread:$0]  %s149, 2048, %s151, [#allocation4], 64, 64, 4
        $region16: #{tpu_custom_call.1} parent=11 // pred_fallthru
          _
        // Predicated region
        $region17: #{tpu_custom_call.1} parent=11 // pred_check
          %p157 = pneg %p55
        $region18: #{tpu_custom_call.1} parent=11 // pred_check_branch
          %159 = sbr.rel (%p157) target = $region20
        $region19: #{tpu_custom_call.1} parent=11 // pred_region
          %161 = vsyncadd [#allocation7], 0
          %s162 = sshll.u32 %s1, 4
          %s163 = int_to_ptr.hbm [resolvable:$true] %s162
          %s164 = sshll.u32 [#allocation6], 4
          %s165 = int_to_ptr.vmem [resolvable:$true] %s164
          %170 = dma.hbm_to_vmem [thread:$0]  %s163, 4096, %s165, [#allocation7], 128, 128, 8
        $region20: #{tpu_custom_call.1} parent=11 // pred_fallthru
          _
      $region12: #{tpu_custom_call.1} parent=5 // pred_fallthru
        _
      %p171 = scmp.lt.s32.totalorder %s13, 3
      // Predicated region
      $region21: #{tpu_custom_call.1} parent=5 // pred_check
        %p172 = pneg %p171
      $region22: #{tpu_custom_call.1} parent=5 // pred_check_branch
        %174 = sbr.rel (%p172) target = $region24
      $region23: #{tpu_custom_call.1} parent=5 // pred_region
        // Predicated region
        $region25: #{tpu_custom_call.1} parent=23 // pred_check
          %p175 = pneg %p75
        $region26: #{tpu_custom_call.1} parent=23 // pred_check_branch
          %177 = sbr.rel (%p175) target = $region28
        $region27: #{tpu_custom_call.1} parent=23 // pred_region
          %s178 = sand.u32 %s13, 1
          %s179 = scalar_lea.sflag [#allocation4], %s178
          %s180 = sand.u32 %s65, 1
          %s181 = smul.addr %s180, 64
          %s182 = scalar_lea.vmem [#allocation8], %s181
          %184 = vsyncadd %s179, 0
          %s185 = smul.addr %s13, 16
          %s186 = smul.addr %s185, 4
          %s187 = scalar_lea.hbm %s2, %s186
          %s188 = sshll.u32 %s187, 4
          %s189 = int_to_ptr.hbm [resolvable:$true] %s188
          %s190 = sshll.u32 %s182, 4
          %s191 = int_to_ptr.vmem [resolvable:$true] %s190
          %196 = dma.hbm_to_vmem [thread:$0]  %s189, 1024, %s191, %s179, 64, 64, 4
        $region28: #{tpu_custom_call.1} parent=23 // pred_fallthru
          _
        // Predicated region
        $region29: #{tpu_custom_call.1} parent=23 // pred_check
          %p197 = pneg %p101
        $region30: #{tpu_custom_call.1} parent=23 // pred_check_branch
          %199 = sbr.rel (%p197) target = $region32
        $region31: #{tpu_custom_call.1} parent=23 // pred_region
          %s200 = sand.u32 %s13, 1
          %s201 = scalar_lea.sflag [#allocation4], %s200
          %s202 = sand.u32 %s91, 1
          %s203 = scalar_lea.vmem [#allocation9], %s202
          %205 = vsyncadd %s201, 0
          %s206 = scalar_lea.hbm %s3, %s13
          %s208 = sshll.u32 %s206, 4
          %s209 = int_to_ptr.hbm [resolvable:$true] %s208
          %s210 = sshll.u32 %s203, 4
          %s211 = int_to_ptr.vmem [resolvable:$true] %s210
          %213 = dma.hbm_to_vmem [thread:$0]  %s209, 16, %s211, %s201
        $region32: #{tpu_custom_call.1} parent=23 // pred_fallthru
          _
      $region24: #{tpu_custom_call.1} parent=5 // pred_fallthru
        _
      %p214 = scmp.le.s32.totalorder 1, %s13
      %p215 = scmp.lt.s32.totalorder %s13, 4
      %p216 = pnand %p214, %p215
      %p217 = pneg %p216
      // Predicated region
      $region33: #{tpu_custom_call.1} parent=5 // pred_check
        _
      $region34: #{tpu_custom_call.1} parent=5 // pred_check_branch
        %219 = sbr.rel (%p216) target = $region36
      $region35: #{tpu_custom_call.1} parent=5 // pred_region
        %s220 = ssub.s32 %s13, 1
        // Predicated region
        $region37: #{tpu_custom_call.1} parent=35 // pred_check
          %p221 = pneg %p34
        $region38: #{tpu_custom_call.1} parent=35 // pred_check_branch
          %223 = sbr.rel (%p221) target = $region40
        $region39: #{tpu_custom_call.1} parent=35 // pred_region
          %225 = dma.done [#allocation4], 2048
        $region40: #{tpu_custom_call.1} parent=35 // pred_fallthru
          _
        // Predicated region
        $region41: #{tpu_custom_call.1} parent=35 // pred_check
          %p226 = pneg %p55
        $region42: #{tpu_custom_call.1} parent=35 // pred_check_branch
          %228 = sbr.rel (%p226) target = $region44
        $region43: #{tpu_custom_call.1} parent=35 // pred_region
          %230 = dma.done [#allocation7], 4096
        $region44: #{tpu_custom_call.1} parent=35 // pred_fallthru
          _
        %s231 = sand.u32 %s18, 1
        %s232 = scalar_lea.sflag [#allocation4], %s231
        %s233 = sand.u32 %s68, 1
        %s234 = smul.addr %s233, 64
        %s235 = scalar_lea.vmem [#allocation8], %s234
        // Predicated region
        $region45: #{tpu_custom_call.1} parent=35 // pred_check
          %p236 = pneg %p81
        $region46: #{tpu_custom_call.1} parent=35 // pred_check_branch
          %238 = sbr.rel (%p236) target = $region48
        $region47: #{tpu_custom_call.1} parent=35 // pred_region
          %240 = dma.done %s232, 1024
        $region48: #{tpu_custom_call.1} parent=35 // pred_fallthru
          _
        %s241 = sand.u32 %s18, 1
        %s242 = scalar_lea.sflag [#allocation4], %s241
        %s243 = sand.u32 %s94, 1
        %s244 = scalar_lea.vmem [#allocation9], %s243
        // Predicated region
        $region49: #{tpu_custom_call.1} parent=35 // pred_check
          %p245 = pneg %p107
        $region50: #{tpu_custom_call.1} parent=35 // pred_check_branch
          %247 = sbr.rel (%p245) target = $region52
        $region51: #{tpu_custom_call.1} parent=35 // pred_region
          %249 = dma.done %s242, 16
        $region52: #{tpu_custom_call.1} parent=35 // pred_fallthru
          _
        %p250 = pneg %p34
        %p251 = pneg %p31
        %p252 = pneg %p55
        %p253 = pneg %p52
        %s254 = sand.u32 %s18, 1
        %s255 = scalar_lea.sflag [#allocation4], %s254
        %s256 = sand.u32 %s68, 1
        %s257 = smul.addr %s256, 64
        %s258 = scalar_lea.vmem [#allocation8], %s257
        %p259 = pneg %p81
        %p260 = pneg %p78
        %s261 = sand.u32 %s18, 1
        %s262 = scalar_lea.sflag [#allocation4], %s261
        %s263 = sand.u32 %s94, 1
        %s264 = scalar_lea.vmem [#allocation9], %s263
        %p265 = pneg %p107
        %p266 = pneg %p104
        %p267 = pneg %p128
        %p268 = pneg %p125
        %p269 = scmp.eq.s32.totalorder %s18, 0
        // Predicated region
        $region53: #{tpu_custom_call.1} parent=35 // pred_check
          %p270 = pneg %p269
        $region54: #{tpu_custom_call.1} parent=35 // pred_check_branch
          %272 = sbr.rel (%p270) target = $region56
        $region55: #{tpu_custom_call.1} parent=35 // pred_region
          %v273 = vld [vmem:[#allocation3] sm:$0xf]
          %v274 = vld [vmem:[#allocation3 + $0x4] sm:$0xf]
          %v275 = vld [vmem:[#allocation3 + $0x8] sm:$0xf]
          %v276 = vld [vmem:[#allocation3 + $0xc] sm:$0xf]
          %v277 = vld [vmem:[#allocation3 + $0x10] sm:$0xf]
          %v278 = vld [vmem:[#allocation3 + $0x14] sm:$0xf]
          %v279 = vld [vmem:[#allocation3 + $0x18] sm:$0xf]
          %v280 = vld [vmem:[#allocation3 + $0x1c] sm:$0xf]
          %v281 = vld [vmem:[#allocation3 + $0x20] sm:$0xf]
          %v282 = vld [vmem:[#allocation3 + $0x24] sm:$0xf]
          %v283 = vld [vmem:[#allocation3 + $0x28] sm:$0xf]
          %v284 = vld [vmem:[#allocation3 + $0x2c] sm:$0xf]
          %v285 = vld [vmem:[#allocation3 + $0x30] sm:$0xf]
          %v286 = vld [vmem:[#allocation3 + $0x34] sm:$0xf]
          %v287 = vld [vmem:[#allocation3 + $0x38] sm:$0xf]
          %v288 = vld [vmem:[#allocation3 + $0x3c] sm:$0xf]
          %v289 = vld [vmem:[#allocation3 + $0x40] sm:$0xf]
          %v290 = vld [vmem:[#allocation3 + $0x44] sm:$0xf]
          %v291 = vld [vmem:[#allocation3 + $0x48] sm:$0xf]
          %v292 = vld [vmem:[#allocation3 + $0x4c] sm:$0xf]
          %v293 = vld [vmem:[#allocation3 + $0x50] sm:$0xf]
          %v294 = vld [vmem:[#allocation3 + $0x54] sm:$0xf]
          %v295 = vld [vmem:[#allocation3 + $0x58] sm:$0xf]
          %v296 = vld [vmem:[#allocation3 + $0x5c] sm:$0xf]
          %v297 = vld [vmem:[#allocation3 + $0x60] sm:$0xf]
          %v298 = vld [vmem:[#allocation3 + $0x64] sm:$0xf]
          %v299 = vld [vmem:[#allocation3 + $0x68] sm:$0xf]
          %v300 = vld [vmem:[#allocation3 + $0x6c] sm:$0xf]
          %v301 = vld [vmem:[#allocation3 + $0x70] sm:$0xf]
          %v302 = vld [vmem:[#allocation3 + $0x74] sm:$0xf]
          %v303 = vld [vmem:[#allocation3 + $0x78] sm:$0xf]
          %v304 = vld [vmem:[#allocation3 + $0x7c] sm:$0xf]
          %305 = vst [vmem:[#allocation2] sm:$0xf] %v273
          %306 = vst [vmem:[#allocation2 + $0x4] sm:$0xf] %v274
          %307 = vst [vmem:[#allocation2 + $0x8] sm:$0xf] %v275
          %308 = vst [vmem:[#allocation2 + $0xc] sm:$0xf] %v276
          %309 = vst [vmem:[#allocation2 + $0x10] sm:$0xf] %v277
          %310 = vst [vmem:[#allocation2 + $0x14] sm:$0xf] %v278
          %311 = vst [vmem:[#allocation2 + $0x18] sm:$0xf] %v279
          %312 = vst [vmem:[#allocation2 + $0x1c] sm:$0xf] %v280
          %313 = vst [vmem:[#allocation2 + $0x20] sm:$0xf] %v281
          %314 = vst [vmem:[#allocation2 + $0x24] sm:$0xf] %v282
          %315 = vst [vmem:[#allocation2 + $0x28] sm:$0xf] %v283
          %316 = vst [vmem:[#allocation2 + $0x2c] sm:$0xf] %v284
          %317 = vst [vmem:[#allocation2 + $0x30] sm:$0xf] %v285
          %318 = vst [vmem:[#allocation2 + $0x34] sm:$0xf] %v286
          %319 = vst [vmem:[#allocation2 + $0x38] sm:$0xf] %v287
          %320 = vst [vmem:[#allocation2 + $0x3c] sm:$0xf] %v288
          %321 = vst [vmem:[#allocation2 + $0x40] sm:$0xf] %v289
          %322 = vst [vmem:[#allocation2 + $0x44] sm:$0xf] %v290
          %323 = vst [vmem:[#allocation2 + $0x48] sm:$0xf] %v291
          %324 = vst [vmem:[#allocation2 + $0x4c] sm:$0xf] %v292
          %325 = vst [vmem:[#allocation2 + $0x50] sm:$0xf] %v293
          %326 = vst [vmem:[#allocation2 + $0x54] sm:$0xf] %v294
          %327 = vst [vmem:[#allocation2 + $0x58] sm:$0xf] %v295
          %328 = vst [vmem:[#allocation2 + $0x5c] sm:$0xf] %v296
          %329 = vst [vmem:[#allocation2 + $0x60] sm:$0xf] %v297
          %330 = vst [vmem:[#allocation2 + $0x64] sm:$0xf] %v298
          %331 = vst [vmem:[#allocation2 + $0x68] sm:$0xf] %v299
          %332 = vst [vmem:[#allocation2 + $0x6c] sm:$0xf] %v300
          %333 = vst [vmem:[#allocation2 + $0x70] sm:$0xf] %v301
          %334 = vst [vmem:[#allocation2 + $0x74] sm:$0xf] %v302
          %335 = vst [vmem:[#allocation2 + $0x78] sm:$0xf] %v303
          %336 = vst [vmem:[#allocation2 + $0x7c] sm:$0xf] %v304
        $region56: #{tpu_custom_call.1} parent=35 // pred_fallthru
          _
        %v337 = vld [vmem:[#allocation2] sm:$0xf]
        %v338 = vld [vmem:[#allocation2 + $0x4] sm:$0xf]
        %v339 = vld [vmem:[#allocation2 + $0x8] sm:$0xf]
        %v340 = vld [vmem:[#allocation2 + $0xc] sm:$0xf]
        %v341 = vld [vmem:[#allocation2 + $0x10] sm:$0xf]
        %v342 = vld [vmem:[#allocation2 + $0x14] sm:$0xf]
        %v343 = vld [vmem:[#allocation2 + $0x18] sm:$0xf]
        %v344 = vld [vmem:[#allocation2 + $0x1c] sm:$0xf]
        %v345 = vld [vmem:[#allocation2 + $0x20] sm:$0xf]
        %v346 = vld [vmem:[#allocation2 + $0x24] sm:$0xf]
        %v347 = vld [vmem:[#allocation2 + $0x28] sm:$0xf]
        %v348 = vld [vmem:[#allocation2 + $0x2c] sm:$0xf]
        %v349 = vld [vmem:[#allocation2 + $0x30] sm:$0xf]
        %v350 = vld [vmem:[#allocation2 + $0x34] sm:$0xf]
        %v351 = vld [vmem:[#allocation2 + $0x38] sm:$0xf]
        %v352 = vld [vmem:[#allocation2 + $0x3c] sm:$0xf]
        %v353 = vld [vmem:[#allocation2 + $0x40] sm:$0xf]
        %v354 = vld [vmem:[#allocation2 + $0x44] sm:$0xf]
        %v355 = vld [vmem:[#allocation2 + $0x48] sm:$0xf]
        %v356 = vld [vmem:[#allocation2 + $0x4c] sm:$0xf]
        %v357 = vld [vmem:[#allocation2 + $0x50] sm:$0xf]
        %v358 = vld [vmem:[#allocation2 + $0x54] sm:$0xf]
        %v359 = vld [vmem:[#allocation2 + $0x58] sm:$0xf]
        %v360 = vld [vmem:[#allocation2 + $0x5c] sm:$0xf]
        %v361 = vld [vmem:[#allocation2 + $0x60] sm:$0xf]
        %v362 = vld [vmem:[#allocation2 + $0x64] sm:$0xf]
        %v363 = vld [vmem:[#allocation2 + $0x68] sm:$0xf]
        %v364 = vld [vmem:[#allocation2 + $0x6c] sm:$0xf]
        %v365 = vld [vmem:[#allocation2 + $0x70] sm:$0xf]
        %v366 = vld [vmem:[#allocation2 + $0x74] sm:$0xf]
        %v367 = vld [vmem:[#allocation2 + $0x78] sm:$0xf]
        %v368 = vld [vmem:[#allocation2 + $0x7c] sm:$0xf]
        %v369 = vld [vmem:[%s235] sm:$0xf]
        %v370 = vld [vmem:[%s235 + $0x4] sm:$0xf]
        %v371 = vld [vmem:[%s235 + $0x8] sm:$0xf]
        %v372 = vld [vmem:[%s235 + $0xc] sm:$0xf]
        %v373 = vld [vmem:[%s235 + $0x10] sm:$0xf]
        %v374 = vld [vmem:[%s235 + $0x14] sm:$0xf]
        %v375 = vld [vmem:[%s235 + $0x18] sm:$0xf]
        %v376 = vld [vmem:[%s235 + $0x1c] sm:$0xf]
        %v377 = vld [vmem:[%s235 + $0x20] sm:$0xf]
        %v378 = vld [vmem:[%s235 + $0x24] sm:$0xf]
        %v379 = vld [vmem:[%s235 + $0x28] sm:$0xf]
        %v380 = vld [vmem:[%s235 + $0x2c] sm:$0xf]
        %v381 = vld [vmem:[%s235 + $0x30] sm:$0xf]
        %v382 = vld [vmem:[%s235 + $0x34] sm:$0xf]
        %v383 = vld [vmem:[%s235 + $0x38] sm:$0xf]
        %v384 = vld [vmem:[%s235 + $0x3c] sm:$0xf]
        %v417 = vunpack.c.l.b16 %v337
        %v418 = vunpack.c.l.b16 %v338
        %v419 = vunpack.c.l.b16 %v339
        %v420 = vunpack.c.l.b16 %v340
        %v421 = vunpack.c.l.b16 %v341
        %v422 = vunpack.c.l.b16 %v342
        %v423 = vunpack.c.l.b16 %v343
        %v424 = vunpack.c.l.b16 %v344
        %v425 = vunpack.c.l.b16 %v345
        %v426 = vunpack.c.l.b16 %v346
        %v427 = vunpack.c.l.b16 %v347
        %v428 = vunpack.c.l.b16 %v348
        %v429 = vunpack.c.l.b16 %v349
        %v430 = vunpack.c.l.b16 %v350
        %v431 = vunpack.c.l.b16 %v351
        %v432 = vunpack.c.l.b16 %v352
        %v433 = vunpack.c.l.b16 %v353
        %v434 = vunpack.c.l.b16 %v354
        %v435 = vunpack.c.l.b16 %v355
        %v436 = vunpack.c.l.b16 %v356
        %v437 = vunpack.c.l.b16 %v357
        %v438 = vunpack.c.l.b16 %v358
        %v439 = vunpack.c.l.b16 %v359
        %v440 = vunpack.c.l.b16 %v360
        %v441 = vunpack.c.l.b16 %v361
        %v442 = vunpack.c.l.b16 %v362
        %v443 = vunpack.c.l.b16 %v363
        %v444 = vunpack.c.l.b16 %v364
        %v445 = vunpack.c.l.b16 %v365
        %v446 = vunpack.c.l.b16 %v366
        %v447 = vunpack.c.l.b16 %v367
        %v448 = vunpack.c.l.b16 %v368
        %v449 = vpack.c.b16 %v418, %v417
        %v450 = vpack.c.b16 %v420, %v419
        %v451 = vpack.c.b16 %v422, %v421
        %v452 = vpack.c.b16 %v424, %v423
        %v453 = vpack.c.b16 %v426, %v425
        %v454 = vpack.c.b16 %v428, %v427
        %v455 = vpack.c.b16 %v430, %v429
        %v456 = vpack.c.b16 %v432, %v431
        %v457 = vpack.c.b16 %v434, %v433
        %v458 = vpack.c.b16 %v436, %v435
        %v459 = vpack.c.b16 %v438, %v437
        %v460 = vpack.c.b16 %v440, %v439
        %v461 = vpack.c.b16 %v442, %v441
        %v462 = vpack.c.b16 %v444, %v443
        %v463 = vpack.c.b16 %v446, %v445
        %v464 = vpack.c.b16 %v448, %v447
        %v497 = vunpack.c.l.b16 %v369
        %v498 = vunpack.c.l.b16 %v370
        %v499 = vunpack.c.l.b16 %v371
        %v500 = vunpack.c.l.b16 %v372
        %v501 = vunpack.c.l.b16 %v373
        %v502 = vunpack.c.l.b16 %v374
        %v503 = vunpack.c.l.b16 %v375
        %v504 = vunpack.c.l.b16 %v376
        %v505 = vunpack.c.l.b16 %v377
        %v506 = vunpack.c.l.b16 %v378
        %v507 = vunpack.c.l.b16 %v379
        %v508 = vunpack.c.l.b16 %v380
        %v509 = vunpack.c.l.b16 %v381
        %v510 = vunpack.c.l.b16 %v382
        %v511 = vunpack.c.l.b16 %v383
        %v512 = vunpack.c.l.b16 %v384
        %v513 = vpack.c.b16 %v498, %v497
        %v514 = vpack.c.b16 %v500, %v499
        %v515 = vpack.c.b16 %v502, %v501
        %v516 = vpack.c.b16 %v504, %v503
        %v517 = vpack.c.b16 %v506, %v505
        %v518 = vpack.c.b16 %v508, %v507
        %v519 = vpack.c.b16 %v510, %v509
        %v520 = vpack.c.b16 %v512, %v511
        %529 = vmatpush.bf16.msra.mxu0 %v520
        %530 = vmatpush.bf16.msra.mxu0 %v519
        %531 = vmatpush.bf16.msra.mxu0 %v518
        %532 = vmatpush.bf16.msra.mxu0 %v517
        %533 = vmatpush.bf16.msra.mxu0 %v516
        %534 = vmatpush.bf16.msra.mxu0 %v515
        %535 = vmatpush.bf16.msra.mxu0 %v514
        %536 = vmatpush.bf16.msra.mxu0 %v513
        %537 = vmatmul.bf16.gmra.mxu0 %v449
        %v538 = vpop.f32.mrf.mxu0
        %v539 = vadd.f32 0.0, %v538
        %v540 = vpop.f32.mrf.mxu0
        %v541 = vadd.f32 0.0, %v540
        %542 = vmatmul.bf16.gmra.mxu0 %v450
        %v543 = vpop.f32.mrf.mxu0
        %v544 = vadd.f32 0.0, %v543
        %v545 = vpop.f32.mrf.mxu0
        %v546 = vadd.f32 0.0, %v545
        %547 = vmatmul.bf16.gmra.mxu0 %v451
        %v548 = vpop.f32.mrf.mxu0
        %v549 = vadd.f32 0.0, %v548
        %v550 = vpop.f32.mrf.mxu0
        %v551 = vadd.f32 0.0, %v550
        %552 = vmatmul.bf16.gmra.mxu0 %v452
        %v553 = vpop.f32.mrf.mxu0
        %v554 = vadd.f32 0.0, %v553
        %v555 = vpop.f32.mrf.mxu0
        %v556 = vadd.f32 0.0, %v555
        %557 = vmatmul.bf16.gmra.mxu0 %v453
        %v558 = vpop.f32.mrf.mxu0
        %v559 = vadd.f32 0.0, %v558
        %v560 = vpop.f32.mrf.mxu0
        %v561 = vadd.f32 0.0, %v560
        %562 = vmatmul.bf16.gmra.mxu0 %v454
        %v563 = vpop.f32.mrf.mxu0
        %v564 = vadd.f32 0.0, %v563
        %v565 = vpop.f32.mrf.mxu0
        %v566 = vadd.f32 0.0, %v565
        %567 = vmatmul.bf16.gmra.mxu0 %v455
        %v568 = vpop.f32.mrf.mxu0
        %v569 = vadd.f32 0.0, %v568
        %v570 = vpop.f32.mrf.mxu0
        %v571 = vadd.f32 0.0, %v570
        %572 = vmatmul.bf16.gmra.mxu0 %v456
        %v573 = vpop.f32.mrf.mxu0
        %v574 = vadd.f32 0.0, %v573
        %v575 = vpop.f32.mrf.mxu0
        %v576 = vadd.f32 0.0, %v575
        %577 = vmatmul.bf16.gmra.mxu0 %v457
        %v578 = vpop.f32.mrf.mxu0
        %v579 = vadd.f32 0.0, %v578
        %v580 = vpop.f32.mrf.mxu0
        %v581 = vadd.f32 0.0, %v580
        %582 = vmatmul.bf16.gmra.mxu0 %v458
        %v583 = vpop.f32.mrf.mxu0
        %v584 = vadd.f32 0.0, %v583
        %v585 = vpop.f32.mrf.mxu0
        %v586 = vadd.f32 0.0, %v585
        %587 = vmatmul.bf16.gmra.mxu0 %v459
        %v588 = vpop.f32.mrf.mxu0
        %v589 = vadd.f32 0.0, %v588
        %v590 = vpop.f32.mrf.mxu0
        %v591 = vadd.f32 0.0, %v590
        %592 = vmatmul.bf16.gmra.mxu0 %v460
        %v593 = vpop.f32.mrf.mxu0
        %v594 = vadd.f32 0.0, %v593
        %v595 = vpop.f32.mrf.mxu0
        %v596 = vadd.f32 0.0, %v595
        %597 = vmatmul.bf16.gmra.mxu0 %v461
        %v598 = vpop.f32.mrf.mxu0
        %v599 = vadd.f32 0.0, %v598
        %v600 = vpop.f32.mrf.mxu0
        %v601 = vadd.f32 0.0, %v600
        %602 = vmatmul.bf16.gmra.mxu0 %v462
        %v603 = vpop.f32.mrf.mxu0
        %v604 = vadd.f32 0.0, %v603
        %v605 = vpop.f32.mrf.mxu0
        %v606 = vadd.f32 0.0, %v605
        %607 = vmatmul.bf16.gmra.mxu0 %v463
        %v608 = vpop.f32.mrf.mxu0
        %v609 = vadd.f32 0.0, %v608
        %v610 = vpop.f32.mrf.mxu0
        %v611 = vadd.f32 0.0, %v610
        %612 = vmatmul.bf16.gmra.mxu0 %v464
        %v613 = vpop.f32.mrf.mxu0
        %v614 = vadd.f32 0.0, %v613
        %v615 = vpop.f32.mrf.mxu0
        %v616 = vadd.f32 0.0, %v615
        %617 = vdwg.mxu0
        %v618 = vpack.c.bf16 %v541, %v539
        %v619 = vpack.c.bf16 %v546, %v544
        %v620 = vpack.c.bf16 %v551, %v549
        %v621 = vpack.c.bf16 %v556, %v554
        %v622 = vpack.c.bf16 %v561, %v559
        %v623 = vpack.c.bf16 %v566, %v564
        %v624 = vpack.c.bf16 %v571, %v569
        %v625 = vpack.c.bf16 %v576, %v574
        %v626 = vpack.c.bf16 %v581, %v579
        %v627 = vpack.c.bf16 %v586, %v584
        %v628 = vpack.c.bf16 %v591, %v589
        %v629 = vpack.c.bf16 %v596, %v594
        %v630 = vpack.c.bf16 %v601, %v599
        %v631 = vpack.c.bf16 %v606, %v604
        %v632 = vpack.c.bf16 %v611, %v609
        %v633 = vpack.c.bf16 %v616, %v614
        %v634 = vld [vmem:[#allocation6] sm:$0xff]
        %v635 = vld [vmem:[#allocation6 + $0x8] sm:$0xff]
        %v636 = vld [vmem:[#allocation6 + $0x10] sm:$0xff]
        %v637 = vld [vmem:[#allocation6 + $0x18] sm:$0xff]
        %v638 = vld [vmem:[#allocation6 + $0x20] sm:$0xff]
        %v639 = vld [vmem:[#allocation6 + $0x28] sm:$0xff]
        %v640 = vld [vmem:[#allocation6 + $0x30] sm:$0xff]
        %v641 = vld [vmem:[#allocation6 + $0x38] sm:$0xff]
        %v642 = vld [vmem:[#allocation6 + $0x40] sm:$0xff]
        %v643 = vld [vmem:[#allocation6 + $0x48] sm:$0xff]
        %v644 = vld [vmem:[#allocation6 + $0x50] sm:$0xff]
        %v645 = vld [vmem:[#allocation6 + $0x58] sm:$0xff]
        %v646 = vld [vmem:[#allocation6 + $0x60] sm:$0xff]
        %v647 = vld [vmem:[#allocation6 + $0x68] sm:$0xff]
        %v648 = vld [vmem:[#allocation6 + $0x70] sm:$0xff]
        %v649 = vld [vmem:[#allocation6 + $0x78] sm:$0xff]
        %v650 = vld [vmem:[#allocation6 + $0x80] sm:$0xff]
        %v651 = vld [vmem:[#allocation6 + $0x88] sm:$0xff]
        %v652 = vld [vmem:[#allocation6 + $0x90] sm:$0xff]
        %v653 = vld [vmem:[#allocation6 + $0x98] sm:$0xff]
        %v654 = vld [vmem:[#allocation6 + $0xa0] sm:$0xff]
        %v655 = vld [vmem:[#allocation6 + $0xa8] sm:$0xff]
        %v656 = vld [vmem:[#allocation6 + $0xb0] sm:$0xff]
        %v657 = vld [vmem:[#allocation6 + $0xb8] sm:$0xff]
        %v658 = vld [vmem:[#allocation6 + $0xc0] sm:$0xff]
        %v659 = vld [vmem:[#allocation6 + $0xc8] sm:$0xff]
        %v660 = vld [vmem:[#allocation6 + $0xd0] sm:$0xff]
        %v661 = vld [vmem:[#allocation6 + $0xd8] sm:$0xff]
        %v662 = vld [vmem:[#allocation6 + $0xe0] sm:$0xff]
        %v663 = vld [vmem:[#allocation6 + $0xe8] sm:$0xff]
        %v664 = vld [vmem:[#allocation6 + $0xf0] sm:$0xff]
        %v665 = vld [vmem:[#allocation6 + $0xf8] sm:$0xff]
        %v666 = vld [vmem:[%s244] sm:$0x1]
        %v668 = vperm.slane %v666, 0
        %v702 = vunpack.c.l.b16 %v634
        %v703 = vunpack.c.h.b16 %v634
        %v704 = vunpack.c.l.b16 %v635
        %v705 = vunpack.c.h.b16 %v635
        %v706 = vunpack.c.l.b16 %v636
        %v707 = vunpack.c.h.b16 %v636
        %v708 = vunpack.c.l.b16 %v637
        %v709 = vunpack.c.h.b16 %v637
        %v710 = vunpack.c.l.b16 %v638
        %v711 = vunpack.c.h.b16 %v638
        %v712 = vunpack.c.l.b16 %v639
        %v713 = vunpack.c.h.b16 %v639
        %v714 = vunpack.c.l.b16 %v640
        %v715 = vunpack.c.h.b16 %v640
        %v716 = vunpack.c.l.b16 %v641
        %v717 = vunpack.c.h.b16 %v641
        %v718 = vunpack.c.l.b16 %v642
        %v719 = vunpack.c.h.b16 %v642
        %v720 = vunpack.c.l.b16 %v643
        %v721 = vunpack.c.h.b16 %v643
        %v722 = vunpack.c.l.b16 %v644
        %v723 = vunpack.c.h.b16 %v644
        %v724 = vunpack.c.l.b16 %v645
        %v725 = vunpack.c.h.b16 %v645
        %v726 = vunpack.c.l.b16 %v646
        %v727 = vunpack.c.h.b16 %v646
        %v728 = vunpack.c.l.b16 %v647
        %v729 = vunpack.c.h.b16 %v647
        %v730 = vunpack.c.l.b16 %v648
        %v731 = vunpack.c.h.b16 %v648
        %v732 = vunpack.c.l.b16 %v649
        %v733 = vunpack.c.h.b16 %v649
        %v734 = vunpack.c.l.b16 %v650
        %v735 = vunpack.c.h.b16 %v650
        %v736 = vunpack.c.l.b16 %v651
        %v737 = vunpack.c.h.b16 %v651
        %v738 = vunpack.c.l.b16 %v652
        %v739 = vunpack.c.h.b16 %v652
        %v740 = vunpack.c.l.b16 %v653
        %v741 = vunpack.c.h.b16 %v653
        %v742 = vunpack.c.l.b16 %v654
        %v743 = vunpack.c.h.b16 %v654
        %v744 = vunpack.c.l.b16 %v655
        %v745 = vunpack.c.h.b16 %v655
        %v746 = vunpack.c.l.b16 %v656
        %v747 = vunpack.c.h.b16 %v656
        %v748 = vunpack.c.l.b16 %v657
        %v749 = vunpack.c.h.b16 %v657
        %v750 = vunpack.c.l.b16 %v658
        %v751 = vunpack.c.h.b16 %v658
        %v752 = vunpack.c.l.b16 %v659
        %v753 = vunpack.c.h.b16 %v659
        %v754 = vunpack.c.l.b16 %v660
        %v755 = vunpack.c.h.b16 %v660
        %v756 = vunpack.c.l.b16 %v661
        %v757 = vunpack.c.h.b16 %v661
        %v758 = vunpack.c.l.b16 %v662
        %v759 = vunpack.c.h.b16 %v662
        %v760 = vunpack.c.l.b16 %v663
        %v761 = vunpack.c.h.b16 %v663
        %v762 = vunpack.c.l.b16 %v664
        %v763 = vunpack.c.h.b16 %v664
        %v764 = vunpack.c.l.b16 %v665
        %v765 = vunpack.c.h.b16 %v665
        %v766 = vpack.c.b16 %v704, %v702
        %v767 = vpack.c.b16 %v705, %v703
        %v768 = vpack.c.b16 %v708, %v706
        %v769 = vpack.c.b16 %v709, %v707
        %v770 = vpack.c.b16 %v712, %v710
        %v771 = vpack.c.b16 %v713, %v711
        %v772 = vpack.c.b16 %v716, %v714
        %v773 = vpack.c.b16 %v717, %v715
        %v774 = vpack.c.b16 %v720, %v718
        %v775 = vpack.c.b16 %v721, %v719
        %v776 = vpack.c.b16 %v724, %v722
        %v777 = vpack.c.b16 %v725, %v723
        %v778 = vpack.c.b16 %v728, %v726
        %v779 = vpack.c.b16 %v729, %v727
        %v780 = vpack.c.b16 %v732, %v730
        %v781 = vpack.c.b16 %v733, %v731
        %v782 = vpack.c.b16 %v736, %v734
        %v783 = vpack.c.b16 %v737, %v735
        %v784 = vpack.c.b16 %v740, %v738
        %v785 = vpack.c.b16 %v741, %v739
        %v786 = vpack.c.b16 %v744, %v742
        %v787 = vpack.c.b16 %v745, %v743
        %v788 = vpack.c.b16 %v748, %v746
        %v789 = vpack.c.b16 %v749, %v747
        %v790 = vpack.c.b16 %v752, %v750
        %v791 = vpack.c.b16 %v753, %v751
        %v792 = vpack.c.b16 %v756, %v754
        %v793 = vpack.c.b16 %v757, %v755
        %v794 = vpack.c.b16 %v760, %v758
        %v795 = vpack.c.b16 %v761, %v759
        %v796 = vpack.c.b16 %v764, %v762
        %v797 = vpack.c.b16 %v765, %v763
        %830 = vmatpush.bf16.msra.mxu0 %v625
        %831 = vmatpush.bf16.msra.mxu0 %v624
        %832 = vmatpush.bf16.msra.mxu0 %v623
        %833 = vmatpush.bf16.msra.mxu0 %v622
        %834 = vmatpush.bf16.msra.mxu0 %v621
        %835 = vmatpush.bf16.msra.mxu0 %v620
        %836 = vmatpush.bf16.msra.mxu0 %v619
        %837 = vmatpush.bf16.msra.mxu0 %v618
        %838 = vmatmul.bf16.gmra.mxu0 %v766
        %v839 = vpop.f32.mrf.mxu0
        %v840 = vadd.f32 %v668, %v839
        %v841 = vpop.f32.mrf.mxu0
        %v842 = vadd.f32 %v668, %v841
        %843 = vmatmul.bf16.gmra.mxu0 %v768
        %v844 = vpop.f32.mrf.mxu0
        %v845 = vadd.f32 %v668, %v844
        %v846 = vpop.f32.mrf.mxu0
        %v847 = vadd.f32 %v668, %v846
        %848 = vmatmul.bf16.gmra.mxu0 %v770
        %v849 = vpop.f32.mrf.mxu0
        %v850 = vadd.f32 %v668, %v849
        %v851 = vpop.f32.mrf.mxu0
        %v852 = vadd.f32 %v668, %v851
        %853 = vmatmul.bf16.gmra.mxu0 %v772
        %v854 = vpop.f32.mrf.mxu0
        %v855 = vadd.f32 %v668, %v854
        %v856 = vpop.f32.mrf.mxu0
        %v857 = vadd.f32 %v668, %v856
        %858 = vmatmul.bf16.gmra.mxu0 %v774
        %v859 = vpop.f32.mrf.mxu0
        %v860 = vadd.f32 %v668, %v859
        %v861 = vpop.f32.mrf.mxu0
        %v862 = vadd.f32 %v668, %v861
        %863 = vmatmul.bf16.gmra.mxu0 %v776
        %v864 = vpop.f32.mrf.mxu0
        %v865 = vadd.f32 %v668, %v864
        %v866 = vpop.f32.mrf.mxu0
        %v867 = vadd.f32 %v668, %v866
        %868 = vmatmul.bf16.gmra.mxu0 %v778
        %v869 = vpop.f32.mrf.mxu0
        %v870 = vadd.f32 %v668, %v869
        %v871 = vpop.f32.mrf.mxu0
        %v872 = vadd.f32 %v668, %v871
        %873 = vmatmul.bf16.gmra.mxu0 %v780
        %v874 = vpop.f32.mrf.mxu0
        %v875 = vadd.f32 %v668, %v874
        %v876 = vpop.f32.mrf.mxu0
        %v877 = vadd.f32 %v668, %v876
        %878 = vmatmul.bf16.gmra.mxu0 %v782
        %v879 = vpop.f32.mrf.mxu0
        %v880 = vadd.f32 %v668, %v879
        %v881 = vpop.f32.mrf.mxu0
        %v882 = vadd.f32 %v668, %v881
        %883 = vmatmul.bf16.gmra.mxu0 %v784
        %v884 = vpop.f32.mrf.mxu0
        %v885 = vadd.f32 %v668, %v884
        %v886 = vpop.f32.mrf.mxu0
        %v887 = vadd.f32 %v668, %v886
        %888 = vmatmul.bf16.gmra.mxu0 %v786
        %v889 = vpop.f32.mrf.mxu0
        %v890 = vadd.f32 %v668, %v889
        %v891 = vpop.f32.mrf.mxu0
        %v892 = vadd.f32 %v668, %v891
        %893 = vmatmul.bf16.gmra.mxu0 %v788
        %v894 = vpop.f32.mrf.mxu0
        %v895 = vadd.f32 %v668, %v894
        %v896 = vpop.f32.mrf.mxu0
        %v897 = vadd.f32 %v668, %v896
        %898 = vmatmul.bf16.gmra.mxu0 %v790
        %v899 = vpop.f32.mrf.mxu0
        %v900 = vadd.f32 %v668, %v899
        %v901 = vpop.f32.mrf.mxu0
        %v902 = vadd.f32 %v668, %v901
        %903 = vmatmul.bf16.gmra.mxu0 %v792
        %v904 = vpop.f32.mrf.mxu0
        %v905 = vadd.f32 %v668, %v904
        %v906 = vpop.f32.mrf.mxu0
        %v907 = vadd.f32 %v668, %v906
        %908 = vmatmul.bf16.gmra.mxu0 %v794
        %v909 = vpop.f32.mrf.mxu0
        %v910 = vadd.f32 %v668, %v909
        %v911 = vpop.f32.mrf.mxu0
        %v912 = vadd.f32 %v668, %v911
        %913 = vmatmul.bf16.gmra.mxu0 %v796
        %v914 = vpop.f32.mrf.mxu0
        %v915 = vadd.f32 %v668, %v914
        %v916 = vpop.f32.mrf.mxu0
        %v917 = vadd.f32 %v668, %v916
        %918 = vdwg.mxu0
        %919 = vmatpush.bf16.msra.mxu0 %v633
        %920 = vmatpush.bf16.msra.mxu0 %v632
        %921 = vmatpush.bf16.msra.mxu0 %v631
        %922 = vmatpush.bf16.msra.mxu0 %v630
        %923 = vmatpush.bf16.msra.mxu0 %v629
        %924 = vmatpush.bf16.msra.mxu0 %v628
        %925 = vmatpush.bf16.msra.mxu0 %v627
        %926 = vmatpush.bf16.msra.mxu0 %v626
        %927 = vmatmul.bf16.gmra.mxu0 %v767
        %v928 = vpop.f32.mrf.mxu0
        %v929 = vadd.f32 %v840, %v928
        %v930 = vpop.f32.mrf.mxu0
        %v931 = vadd.f32 %v842, %v930
        %932 = vmatmul.bf16.gmra.mxu0 %v769
        %v933 = vpop.f32.mrf.mxu0
        %v934 = vadd.f32 %v845, %v933
        %v935 = vpop.f32.mrf.mxu0
        %v936 = vadd.f32 %v847, %v935
        %937 = vmatmul.bf16.gmra.mxu0 %v771
        %v938 = vpop.f32.mrf.mxu0
        %v939 = vadd.f32 %v850, %v938
        %v940 = vpop.f32.mrf.mxu0
        %v941 = vadd.f32 %v852, %v940
        %942 = vmatmul.bf16.gmra.mxu0 %v773
        %v943 = vpop.f32.mrf.mxu0
        %v944 = vadd.f32 %v855, %v943
        %v945 = vpop.f32.mrf.mxu0
        %v946 = vadd.f32 %v857, %v945
        %947 = vmatmul.bf16.gmra.mxu0 %v775
        %v948 = vpop.f32.mrf.mxu0
        %v949 = vadd.f32 %v860, %v948
        %v950 = vpop.f32.mrf.mxu0
        %v951 = vadd.f32 %v862, %v950
        %952 = vmatmul.bf16.gmra.mxu0 %v777
        %v953 = vpop.f32.mrf.mxu0
        %v954 = vadd.f32 %v865, %v953
        %v955 = vpop.f32.mrf.mxu0
        %v956 = vadd.f32 %v867, %v955
        %957 = vmatmul.bf16.gmra.mxu0 %v779
        %v958 = vpop.f32.mrf.mxu0
        %v959 = vadd.f32 %v870, %v958
        %v960 = vpop.f32.mrf.mxu0
        %v961 = vadd.f32 %v872, %v960
        %962 = vmatmul.bf16.gmra.mxu0 %v781
        %v963 = vpop.f32.mrf.mxu0
        %v964 = vadd.f32 %v875, %v963
        %v965 = vpop.f32.mrf.mxu0
        %v966 = vadd.f32 %v877, %v965
        %967 = vmatmul.bf16.gmra.mxu0 %v783
        %v968 = vpop.f32.mrf.mxu0
        %v969 = vadd.f32 %v880, %v968
        %v970 = vpop.f32.mrf.mxu0
        %v971 = vadd.f32 %v882, %v970
        %972 = vmatmul.bf16.gmra.mxu0 %v785
        %v973 = vpop.f32.mrf.mxu0
        %v974 = vadd.f32 %v885, %v973
        %v975 = vpop.f32.mrf.mxu0
        %v976 = vadd.f32 %v887, %v975
        %977 = vmatmul.bf16.gmra.mxu0 %v787
        %v978 = vpop.f32.mrf.mxu0
        %v979 = vadd.f32 %v890, %v978
        %v980 = vpop.f32.mrf.mxu0
        %v981 = vadd.f32 %v892, %v980
        %982 = vmatmul.bf16.gmra.mxu0 %v789
        %v983 = vpop.f32.mrf.mxu0
        %v984 = vadd.f32 %v895, %v983
        %v985 = vpop.f32.mrf.mxu0
        %v986 = vadd.f32 %v897, %v985
        %987 = vmatmul.bf16.gmra.mxu0 %v791
        %v988 = vpop.f32.mrf.mxu0
        %v989 = vadd.f32 %v900, %v988
        %v990 = vpop.f32.mrf.mxu0
        %v991 = vadd.f32 %v902, %v990
        %992 = vmatmul.bf16.gmra.mxu0 %v793
        %v993 = vpop.f32.mrf.mxu0
        %v994 = vadd.f32 %v905, %v993
        %v995 = vpop.f32.mrf.mxu0
        %v996 = vadd.f32 %v907, %v995
        %997 = vmatmul.bf16.gmra.mxu0 %v795
        %v998 = vpop.f32.mrf.mxu0
        %v999 = vadd.f32 %v910, %v998
        %v1000 = vpop.f32.mrf.mxu0
        %v1001 = vadd.f32 %v912, %v1000
        %1002 = vmatmul.bf16.gmra.mxu0 %v797
        %v1003 = vpop.f32.mrf.mxu0
        %v1004 = vadd.f32 %v915, %v1003
        %v1005 = vpop.f32.mrf.mxu0
        %v1006 = vadd.f32 %v917, %v1005
        %1007 = vdwg.mxu0
        %p1008 = scmp.lt.s32.totalorder %s18, 2
        // Predicated region
        $region57: #{tpu_custom_call.1} parent=35 // pred_check
          %p1009 = pneg %p1008
        $region58: #{tpu_custom_call.1} parent=35 // pred_check_branch
          %1011 = sbr.rel (%p1009) target = $region60
        $region59: #{tpu_custom_call.1} parent=35 // pred_region
          %v1012 = vmax.f32 %v929, 0.0
          %v1013 = vmax.f32 %v931, 0.0
          %v1014 = vmax.f32 %v934, 0.0
          %v1015 = vmax.f32 %v936, 0.0
          %v1016 = vmax.f32 %v939, 0.0
          %v1017 = vmax.f32 %v941, 0.0
          %v1018 = vmax.f32 %v944, 0.0
          %v1019 = vmax.f32 %v946, 0.0
          %v1020 = vmax.f32 %v949, 0.0
          %v1021 = vmax.f32 %v951, 0.0
          %v1022 = vmax.f32 %v954, 0.0
          %v1023 = vmax.f32 %v956, 0.0
          %v1024 = vmax.f32 %v959, 0.0
          %v1025 = vmax.f32 %v961, 0.0
          %v1026 = vmax.f32 %v964, 0.0
          %v1027 = vmax.f32 %v966, 0.0
          %v1028 = vmax.f32 %v969, 0.0
          %v1029 = vmax.f32 %v971, 0.0
          %v1030 = vmax.f32 %v974, 0.0
          %v1031 = vmax.f32 %v976, 0.0
          %v1032 = vmax.f32 %v979, 0.0
          %v1033 = vmax.f32 %v981, 0.0
          %v1034 = vmax.f32 %v984, 0.0
          %v1035 = vmax.f32 %v986, 0.0
          %v1036 = vmax.f32 %v989, 0.0
          %v1037 = vmax.f32 %v991, 0.0
          %v1038 = vmax.f32 %v994, 0.0
          %v1039 = vmax.f32 %v996, 0.0
          %v1040 = vmax.f32 %v999, 0.0
          %v1041 = vmax.f32 %v1001, 0.0
          %v1042 = vmax.f32 %v1004, 0.0
          %v1043 = vmax.f32 %v1006, 0.0
          %v1044 = vpack.c.bf16 %v1012, %v1012
          %v1045 = vpack.c.bf16 %v1013, %v1013
          %v1046 = vpack.c.bf16 %v1014, %v1014
          %v1047 = vpack.c.bf16 %v1015, %v1015
          %v1048 = vpack.c.bf16 %v1016, %v1016
          %v1049 = vpack.c.bf16 %v1017, %v1017
          %v1050 = vpack.c.bf16 %v1018, %v1018
          %v1051 = vpack.c.bf16 %v1019, %v1019
          %v1052 = vpack.c.bf16 %v1020, %v1020
          %v1053 = vpack.c.bf16 %v1021, %v1021
          %v1054 = vpack.c.bf16 %v1022, %v1022
          %v1055 = vpack.c.bf16 %v1023, %v1023
          %v1056 = vpack.c.bf16 %v1024, %v1024
          %v1057 = vpack.c.bf16 %v1025, %v1025
          %v1058 = vpack.c.bf16 %v1026, %v1026
          %v1059 = vpack.c.bf16 %v1027, %v1027
          %v1060 = vpack.c.bf16 %v1028, %v1028
          %v1061 = vpack.c.bf16 %v1029, %v1029
          %v1062 = vpack.c.bf16 %v1030, %v1030
          %v1063 = vpack.c.bf16 %v1031, %v1031
          %v1064 = vpack.c.bf16 %v1032, %v1032
          %v1065 = vpack.c.bf16 %v1033, %v1033
          %v1066 = vpack.c.bf16 %v1034, %v1034
          %v1067 = vpack.c.bf16 %v1035, %v1035
          %v1068 = vpack.c.bf16 %v1036, %v1036
          %v1069 = vpack.c.bf16 %v1037, %v1037
          %v1070 = vpack.c.bf16 %v1038, %v1038
          %v1071 = vpack.c.bf16 %v1039, %v1039
          %v1072 = vpack.c.bf16 %v1040, %v1040
          %v1073 = vpack.c.bf16 %v1041, %v1041
          %v1074 = vpack.c.bf16 %v1042, %v1042
          %v1075 = vpack.c.bf16 %v1043, %v1043
          %1076 = vst [vmem:[#allocation2] sm:$0xf] %v1044
          %1077 = vst [vmem:[#allocation2 + $0x4] sm:$0xf] %v1045
          %1078 = vst [vmem:[#allocation2 + $0x8] sm:$0xf] %v1046
          %1079 = vst [vmem:[#allocation2 + $0xc] sm:$0xf] %v1047
          %1080 = vst [vmem:[#allocation2 + $0x10] sm:$0xf] %v1048
          %1081 = vst [vmem:[#allocation2 + $0x14] sm:$0xf] %v1049
          %1082 = vst [vmem:[#allocation2 + $0x18] sm:$0xf] %v1050
          %1083 = vst [vmem:[#allocation2 + $0x1c] sm:$0xf] %v1051
          %1084 = vst [vmem:[#allocation2 + $0x20] sm:$0xf] %v1052
          %1085 = vst [vmem:[#allocation2 + $0x24] sm:$0xf] %v1053
          %1086 = vst [vmem:[#allocation2 + $0x28] sm:$0xf] %v1054
          %1087 = vst [vmem:[#allocation2 + $0x2c] sm:$0xf] %v1055
          %1088 = vst [vmem:[#allocation2 + $0x30] sm:$0xf] %v1056
          %1089 = vst [vmem:[#allocation2 + $0x34] sm:$0xf] %v1057
          %1090 = vst [vmem:[#allocation2 + $0x38] sm:$0xf] %v1058
          %1091 = vst [vmem:[#allocation2 + $0x3c] sm:$0xf] %v1059
          %1092 = vst [vmem:[#allocation2 + $0x40] sm:$0xf] %v1060
          %1093 = vst [vmem:[#allocation2 + $0x44] sm:$0xf] %v1061
          %1094 = vst [vmem:[#allocation2 + $0x48] sm:$0xf] %v1062
          %1095 = vst [vmem:[#allocation2 + $0x4c] sm:$0xf] %v1063
          %1096 = vst [vmem:[#allocation2 + $0x50] sm:$0xf] %v1064
          %1097 = vst [vmem:[#allocation2 + $0x54] sm:$0xf] %v1065
          %1098 = vst [vmem:[#allocation2 + $0x58] sm:$0xf] %v1066
          %1099 = vst [vmem:[#allocation2 + $0x5c] sm:$0xf] %v1067
          %1100 = vst [vmem:[#allocation2 + $0x60] sm:$0xf] %v1068
          %1101 = vst [vmem:[#allocation2 + $0x64] sm:$0xf] %v1069
          %1102 = vst [vmem:[#allocation2 + $0x68] sm:$0xf] %v1070
          %1103 = vst [vmem:[#allocation2 + $0x6c] sm:$0xf] %v1071
          %1104 = vst [vmem:[#allocation2 + $0x70] sm:$0xf] %v1072
          %1105 = vst [vmem:[#allocation2 + $0x74] sm:$0xf] %v1073
          %1106 = vst [vmem:[#allocation2 + $0x78] sm:$0xf] %v1074
          %1107 = vst [vmem:[#allocation2 + $0x7c] sm:$0xf] %v1075
        $region60: #{tpu_custom_call.1} parent=35 // pred_fallthru
          _
        %p1108 = scmp.eq.s32.totalorder %s18, 2
        // Predicated region
        $region61: #{tpu_custom_call.1} parent=35 // pred_check
          %p1109 = pneg %p1108
        $region62: #{tpu_custom_call.1} parent=35 // pred_check_branch
          %1111 = sbr.rel (%p1109) target = $region64
        $region63: #{tpu_custom_call.1} parent=35 // pred_region
          %1112 = vst [vmem:[#allocation10] sm:$0xff] %v929
          %1113 = vst [vmem:[#allocation10 + $0x8] sm:$0xff] %v931
          %1114 = vst [vmem:[#allocation10 + $0x10] sm:$0xff] %v934
          %1115 = vst [vmem:[#allocation10 + $0x18] sm:$0xff] %v936
          %1116 = vst [vmem:[#allocation10 + $0x20] sm:$0xff] %v939
          %1117 = vst [vmem:[#allocation10 + $0x28] sm:$0xff] %v941
          %1118 = vst [vmem:[#allocation10 + $0x30] sm:$0xff] %v944
          %1119 = vst [vmem:[#allocation10 + $0x38] sm:$0xff] %v946
          %1120 = vst [vmem:[#allocation10 + $0x40] sm:$0xff] %v949
          %1121 = vst [vmem:[#allocation10 + $0x48] sm:$0xff] %v951
          %1122 = vst [vmem:[#allocation10 + $0x50] sm:$0xff] %v954
          %1123 = vst [vmem:[#allocation10 + $0x58] sm:$0xff] %v956
          %1124 = vst [vmem:[#allocation10 + $0x60] sm:$0xff] %v959
          %1125 = vst [vmem:[#allocation10 + $0x68] sm:$0xff] %v961
          %1126 = vst [vmem:[#allocation10 + $0x70] sm:$0xff] %v964
          %1127 = vst [vmem:[#allocation10 + $0x78] sm:$0xff] %v966
          %1128 = vst [vmem:[#allocation10 + $0x80] sm:$0xff] %v969
          %1129 = vst [vmem:[#allocation10 + $0x88] sm:$0xff] %v971
          %1130 = vst [vmem:[#allocation10 + $0x90] sm:$0xff] %v974
          %1131 = vst [vmem:[#allocation10 + $0x98] sm:$0xff] %v976
          %1132 = vst [vmem:[#allocation10 + $0xa0] sm:$0xff] %v979
          %1133 = vst [vmem:[#allocation10 + $0xa8] sm:$0xff] %v981
          %1134 = vst [vmem:[#allocation10 + $0xb0] sm:$0xff] %v984
          %1135 = vst [vmem:[#allocation10 + $0xb8] sm:$0xff] %v986
          %1136 = vst [vmem:[#allocation10 + $0xc0] sm:$0xff] %v989
          %1137 = vst [vmem:[#allocation10 + $0xc8] sm:$0xff] %v991
          %1138 = vst [vmem:[#allocation10 + $0xd0] sm:$0xff] %v994
          %1139 = vst [vmem:[#allocation10 + $0xd8] sm:$0xff] %v996
          %1140 = vst [vmem:[#allocation10 + $0xe0] sm:$0xff] %v999
          %1141 = vst [vmem:[#allocation10 + $0xe8] sm:$0xff] %v1001
          %1142 = vst [vmem:[#allocation10 + $0xf0] sm:$0xff] %v1004
          %1143 = vst [vmem:[#allocation10 + $0xf8] sm:$0xff] %v1006
        $region64: #{tpu_custom_call.1} parent=35 // pred_fallthru
          _
        // Predicated region
        $region65: #{tpu_custom_call.1} parent=35 // pred_check
          %p1144 = pneg %p125
        $region66: #{tpu_custom_call.1} parent=35 // pred_check_branch
          %1146 = sbr.rel (%p1144) target = $region68
        $region67: #{tpu_custom_call.1} parent=35 // pred_region
          %1148 = vsyncadd [#allocation5], 0
          %s1149 = sshll.u32 [#allocation10], 4
          %s1150 = int_to_ptr.vmem [resolvable:$true] %s1149
          %s1151 = sshll.u32 %s4, 4
          %s1152 = int_to_ptr.hbm [resolvable:$true] %s1151
          %1157 = dma.vmem_to_hbm [thread:$0]  %s1150, 4096, %s1152, [#allocation5], 128, 128, 8
        $region68: #{tpu_custom_call.1} parent=35 // pred_fallthru
          _
        // Predicated region
        $region69: #{tpu_custom_call.1} parent=35 // pred_check
          %p1158 = pneg %p125
        $region70: #{tpu_custom_call.1} parent=35 // pred_check_branch
          %1160 = sbr.rel (%p1158) target = $region72
        $region71: #{tpu_custom_call.1} parent=35 // pred_region
          %1162 = dma.done [#allocation5], 4096
        $region72: #{tpu_custom_call.1} parent=35 // pred_fallthru
          _
      $region36: #{tpu_custom_call.1} parent=5 // pred_fallthru
        _
      %p1163 = scmp.le.s32.totalorder 2, %s13
      // Predicated region
      $region73: #{tpu_custom_call.1} parent=5 // pred_check
        %p1164 = pneg %p1163
      $region74: #{tpu_custom_call.1} parent=5 // pred_check_branch
        %1166 = sbr.rel (%p1164) target = $region76
      $region75: #{tpu_custom_call.1} parent=5 // pred_region
        %s1167 = ssub.s32 %s13, 2
      $region76: #{tpu_custom_call.1} parent=5 // pred_fallthru
        _
    $region6: #{tpu_custom_call.1} parent=1 // loop_footer
      %s17 = sadd.s32 1, %s13
    $region7: #{tpu_custom_call.1} parent=1 // loop_footer_branch
      %12 = sbr.rel target = $region3
    $region8: #{tpu_custom_call.1} parent=1 // loop_exit
      _
    %1168 = vsyncpa [#allocation4], 1
    %s1169 = scalar_lea.sflag [#allocation4], 1
    %1170 = vsyncpa %s1169, 1
    %1171 = vsyncpa [#allocation7], 1
    %1172 = vsyncpa [#allocation5], 1
    %s1173 = scalar_lea.sflag [#allocation5], 1
    %1174 = vsyncpa %s1173, 1

</llo_original>
